<compile_context>
chip_gen: v6e
topology: v6e:2x2x1
jax: 0.10.0
libtpu: 0.0.40
codegen_flags: <defaults>
</compile_context>

<pallas_src>
import math

import jax
import jax.numpy as jnp
from jax.experimental import pallas as pl
from jax.experimental.pallas import tpu as pltpu


def _round_up(x, m):
    return ((x + m - 1) // m) * m


def _gcn_kernel(x_ref, w_ref, adj_ref, b_ref, o_ref, acc_ref):
    """One (i, k) grid step of  out = adj @ (x @ w) + b."""
    k = pl.program_id(1)

    @pl.when(k == 0)
    def _():
        acc_ref[...] = jnp.zeros_like(acc_ref)

    # support_k = X[k_block] @ W        (bf16 x bf16 -> f32 on the MXU)
    support = jnp.dot(x_ref[...], w_ref[...],
                      preferred_element_type=jnp.float32)
    # acc += adj[i_block, k_block] @ support_k   (bf16 inputs, f32 accumulate)
    acc_ref[...] += jnp.dot(adj_ref[...], support.astype(adj_ref.dtype),
                            preferred_element_type=jnp.float32)

    # Bias is added exactly once, on the last reduction step, then written out.
    @pl.when(k == pl.num_programs(1) - 1)
    def _():
        o_ref[...] = (acc_ref[...] + b_ref[...]).astype(o_ref.dtype)


def graph_convolution(x, weight, adj, bias=None, *,
                      tm=256, tk=256, compute_dtype=jnp.bfloat16):
    """Pallas GCN layer: adj @ (x @ weight) + bias.

    x:      (N, F) float32
    weight: (F, F) float32
    adj:    (N, N) float32
    bias:   (F,)   float32 or None
    returns (N, F) float32
    """
    n, f = x.shape
    assert weight.shape == (f, f)
    assert adj.shape == (n, n)

    lane = 128
    f_pad = _round_up(f, lane)
    n_pad = _round_up(n, lane)
    # Shrink tiles for small problems while keeping (8, 128) alignment;
    # defaults (256) fill the MXU on v6e/v7x and are 128-multiples for v5e.
    tm = min(tm, n_pad)
    tk = min(tk, n_pad)
    n_pad = _round_up(n_pad, math.lcm(tm, tk))

    cdt = compute_dtype
    # Zero-pad to lane-dense shapes (padding contributes exactly zero to the
    # result; padded rows/cols are sliced off at the end).
    x_p = jnp.zeros((n_pad, f_pad), cdt).at[:n, :f].set(x.astype(cdt))
    w_p = jnp.zeros((f_pad, f_pad), cdt).at[:f, :f].set(weight.astype(cdt))
    adj_p = jnp.zeros((n_pad, n_pad), cdt).at[:n, :n].set(adj.astype(cdt))
    if bias is None:
        # Zero bias keeps a single kernel; adding 0 preserves the no-bias path.
        b_p = jnp.zeros((1, f_pad), jnp.float32)
    else:
        b_p = jnp.zeros((1, f_pad), jnp.float32).at[0, :f].set(
            bias.astype(jnp.float32))

    grid = (n_pad // tm, n_pad // tk)

    out_p = pl.pallas_call(
        _gcn_kernel,
        out_shape=jax.ShapeDtypeStruct((n_pad, f_pad), jnp.float32),
        grid=grid,
        in_specs=[
            pl.BlockSpec((tk, f_pad), lambda i, k: (k, 0)),      # x rows (red.)
            pl.BlockSpec((f_pad, f_pad), lambda i, k: (0, 0)),   # W resident
            pl.BlockSpec((tm, tk), lambda i, k: (i, k)),         # adj tile
            pl.BlockSpec((1, f_pad), lambda i, k: (0, 0)),       # bias resident
        ],
        out_specs=pl.BlockSpec((tm, f_pad), lambda i, k: (i, 0)),
        scratch_shapes=[pltpu.VMEM((tm, f_pad), jnp.float32)],
        compiler_params=pltpu.CompilerParams(
            dimension_semantics=("parallel", "arbitrary")),
    )(x_p, w_p, adj_p, b_p)

    return out_p[:n, :f]


def init_params(key, in_features, bias=True):
    """Deterministic re-implementation of GraphConvolution.reset_parameters."""
    stdv = 1.0 / math.sqrt(in_features)
    kw, kb = jax.random.split(key)
    weight = jax.random.uniform(
        kw, (in_features, in_features), jnp.float32, minval=-stdv, maxval=stdv
    )
    b = None
    if bias:
        b = jax.random.uniform(
            kb, (in_features,), jnp.float32, minval=-stdv, maxval=stdv
        )
    return weight, b


if __name__ == "__main__":
    key = jax.random.PRNGKey(0)
    k_x, k_adj, k_param = jax.random.split(key, 3)

    # Small shapes consistent with the module.
    N_NODES = 8
    IN_FEATURES = 32

    x = jax.random.normal(k_x, (N_NODES, IN_FEATURES), jnp.float32)
    a = jax.random.uniform(k_adj, (N_NODES, N_NODES), jnp.float32)
    adj = (a + a.T) * 0.5 + jnp.eye(N_NODES, dtype=jnp.float32)

    weight, bias = init_params(k_param, IN_FEATURES, bias=True)

    out = graph_convolution(x, weight, adj, bias)
    out = jax.block_until_ready(out)

    ref = adj @ (x @ weight) + bias
    assert out.shape == (N_NODES, IN_FEATURES)
    # bf16 MXU inputs with f32 accumulation -> loose tolerance vs f32 reference.
    assert jnp.allclose(out, ref, atol=5e-2, rtol=5e-2), float(
        jnp.max(jnp.abs(out - ref)))

    # Second (still small) case that exercises the multi-tile (i, k) reduction,
    # pl.when init/finalize, and the padding path (N and F not 128-aligned).
    N2, F2 = 300, 40
    k_x2, k_adj2, k_p2 = jax.random.split(jax.random.PRNGKey(1), 3)
    x2 = jax.random.normal(k_x2, (N2, F2), jnp.float32)
    a2 = jax.random.uniform(k_adj2, (N2, N2), jnp.float32) / N2
    adj2 = (a2 + a2.T) * 0.5 + jnp.eye(N2, dtype=jnp.float32)
    w2, b2 = init_params(k_p2, F2, bias=True)

    out2 = jax.block_until_ready(graph_convolution(x2, w2, adj2, b2))
    ref2 = adj2 @ (x2 @ w2) + b2
    assert out2.shape == (N2, F2)
    assert jnp.allclose(out2, ref2, atol=5e-2, rtol=5e-2), float(
        jnp.max(jnp.abs(out2 - ref2)))

    print("KERNEL_OK")
</pallas_src>

<mosaic_0001>
module attributes {stable_mosaic.version = 11 : i64} {
  func.func @_gcn_kernel(%arg0: i32, %arg1: i32, %arg2: memref<128x128xbf16, #tpu.memory_space<vmem>>, %arg3: memref<128x128xbf16, #tpu.memory_space<vmem>>, %arg4: memref<128x128xbf16, #tpu.memory_space<vmem>>, %arg5: memref<1x128xf32, #tpu.memory_space<vmem>>, %arg6: memref<128x128xf32, #tpu.memory_space<vmem>>, %arg7: memref<128x128xf32, #tpu.memory_space<vmem>>) attributes {dimension_semantics = [#tpu.dimension_semantics<parallel>, #tpu.dimension_semantics<arbitrary>], iteration_bounds = array<i64: 1, 1>, scalar_prefetch = 0 : i64, scratch_operands = 1 : i64, tpu.core_type = #tpu.core_type<tc>, window_params = [{transform_indices = @transform_0, window_bounds = array<i64: 128, 128>}, {pipeline_mode = #tpu.pipeline_mode<synchronous>, transform_indices = @transform_1, window_bounds = array<i64: 128, 128>}, {transform_indices = @transform_2, window_bounds = array<i64: 128, 128>}, {pipeline_mode = #tpu.pipeline_mode<synchronous>, transform_indices = @transform_3, window_bounds = array<i64: 1, 128>}, {transform_indices = @transform_4, window_bounds = array<i64: 128, 128>}]} {
    %c0_i32 = arith.constant 0 : i32
    %0 = arith.cmpi eq, %arg1, %c0_i32 : i32
    %1 = arith.extui %0 : i1 to i32
    %c0_i32_0 = arith.constant 0 : i32
    %2 = arith.cmpi ne, %1, %c0_i32_0 : i32
    scf.if %2 {
      %cst_13 = arith.constant 0.000000e+00 : f32
      %15 = vector.broadcast %cst_13 : f32 to vector<128x128xf32>
      %c0_14 = arith.constant 0 : index
      %c0_15 = arith.constant 0 : index
      %16 = vector.load %arg7[%c0_14, %c0_15] : memref<128x128xf32, #tpu.memory_space<vmem>>, vector<128x128xf32>
      tpu.vector_store %arg7[%c0_14, %c0_15], %15 {strides = array<i32>} : memref<128x128xf32, #tpu.memory_space<vmem>>, vector<128x128xf32>,
    } else {
    }
    %c0 = arith.constant 0 : index
    %c0_1 = arith.constant 0 : index
    %3 = vector.load %arg2[%c0, %c0_1] : memref<128x128xbf16, #tpu.memory_space<vmem>>, vector<128x128xbf16>
    %c0_2 = arith.constant 0 : index
    %c0_3 = arith.constant 0 : index
    %4 = vector.load %arg3[%c0_2, %c0_3] : memref<128x128xbf16, #tpu.memory_space<vmem>>, vector<128x128xbf16>
    %cst = arith.constant dense<0.000000e+00> : vector<128x128xf32>
    %5 = tpu.matmul %3, %4, %cst {dimension_numbers = #tpu.dot_dimension_numbers<[1], [0], [0], [1], [0, 0, 1, 1], [], []>} : vector<128x128xbf16>, vector<128x128xbf16>, vector<128x128xf32> -> vector<128x128xf32>
    %c0_4 = arith.constant 0 : index
    %c0_5 = arith.constant 0 : index
    %6 = vector.load %arg7[%c0_4, %c0_5] : memref<128x128xf32, #tpu.memory_space<vmem>>, vector<128x128xf32>
    %c0_6 = arith.constant 0 : index
    %c0_7 = arith.constant 0 : index
    %7 = vector.load %arg4[%c0_6, %c0_7] : memref<128x128xbf16, #tpu.memory_space<vmem>>, vector<128x128xbf16>
    %8 = arith.truncf %5 : vector<128x128xf32> to vector<128x128xbf16>
    %cst_8 = arith.constant dense<0.000000e+00> : vector<128x128xf32>
    %9 = tpu.matmul %7, %8, %cst_8 {dimension_numbers = #tpu.dot_dimension_numbers<[1], [0], [0], [1], [0, 0, 1, 1], [], []>} : vector<128x128xbf16>, vector<128x128xbf16>, vector<128x128xf32> -> vector<128x128xf32>
    %10 = arith.addf %6, %9 : vector<128x128xf32>
    %c0_9 = arith.constant 0 : index
    %c0_10 = arith.constant 0 : index
    %11 = vector.load %arg7[%c0_9, %c0_10] : memref<128x128xf32, #tpu.memory_space<vmem>>, vector<128x128xf32>
    tpu.vector_store %arg7[%c0_9, %c0_10], %10 {strides = array<i32>} : memref<128x128xf32, #tpu.memory_space<vmem>>, vector<128x128xf32>,
    %c0_i32_11 = arith.constant 0 : i32
    %12 = arith.cmpi eq, %arg1, %c0_i32_11 : i32
    %13 = arith.extui %12 : i1 to i32
    %c0_i32_12 = arith.constant 0 : i32
    %14 = arith.cmpi ne, %13, %c0_i32_12 : i32
    scf.if %14 {
      %c0_13 = arith.constant 0 : index
      %c0_14 = arith.constant 0 : index
      %15 = vector.load %arg7[%c0_13, %c0_14] : memref<128x128xf32, #tpu.memory_space<vmem>>, vector<128x128xf32>
      %c0_15 = arith.constant 0 : index
      %c0_16 = arith.constant 0 : index
      %16 = vector.load %arg5[%c0_15, %c0_16] : memref<1x128xf32, #tpu.memory_space<vmem>>, vector<1x128xf32>
      %17 = vector.broadcast %16 : vector<1x128xf32> to vector<128x128xf32>
      %18 = arith.addf %15, %17 : vector<128x128xf32>
      %c0_17 = arith.constant 0 : index
      %c0_18 = arith.constant 0 : index
      %19 = vector.load %arg6[%c0_17, %c0_18] : memref<128x128xf32, #tpu.memory_space<vmem>>, vector<128x128xf32>
      tpu.vector_store %arg6[%c0_17, %c0_18], %18 {strides = array<i32>} : memref<128x128xf32, #tpu.memory_space<vmem>>, vector<128x128xf32>,
    } else {
    }
    return
  }
  func.func @transform_0(%arg0: i32, %arg1: i32) -> (i32, i32) {
    %c0_i32 = arith.constant 0 : i32
    %c0_i32_0 = arith.constant 0 : i32
    return %arg1, %c0_i32 : i32, i32
  }
  func.func @transform_1(%arg0: i32, %arg1: i32) -> (i32, i32) {
    %c0_i32 = arith.constant 0 : i32
    %c0_i32_0 = arith.constant 0 : i32
    %c0_i32_1 = arith.constant 0 : i32
    return %c0_i32, %c0_i32_0 : i32, i32
  }
  func.func @transform_2(%arg0: i32, %arg1: i32) -> (i32, i32) {
    %c0_i32 = arith.constant 0 : i32
    return %arg0, %arg1 : i32, i32
  }
  func.func @transform_3(%arg0: i32, %arg1: i32) -> (i32, i32) {
    %c0_i32 = arith.constant 0 : i32
    %c0_i32_0 = arith.constant 0 : i32
    %c0_i32_1 = arith.constant 0 : i32
    return %c0_i32, %c0_i32_0 : i32, i32
  }
  func.func @transform_4(%arg0: i32, %arg1: i32) -> (i32, i32) {
    %c0_i32 = arith.constant 0 : i32
    %c0_i32_0 = arith.constant 0 : i32
    return %arg0, %c0_i32 : i32, i32
  }
}

</mosaic_0001>

<llo_original>
// kernel: tpu_custom_call.1
$region0: #{tpu_custom_call.1}
  #allocation0 [shape = 'u32[]', space=smem, size = 0x4, offset = 0x4, fixed_abs, tag = 'smem constant byte address 0x4 - core index']
  #allocation1 [shape = 'u32[144,128]{1,0:T(1,128)}', space=vmem, size = 0x12000, scoped, tag = 'internal scratch']
  #allocation2 [shape = 'f32[128,128]{1,0:T(8,128)}', space=vmem, size = 0x10000, scoped, tag = 'scratch operand']
  %s0 = inlined_call_operand.hbm [shape: bf16[128,128], index: 0, kind: input, shape index: {}]
  %s1 = inlined_call_operand.hbm [shape: bf16[128,128], index: 1, kind: input, shape index: {}]
  %s2 = inlined_call_operand.hbm [shape: bf16[128,128], index: 2, kind: input, shape index: {}]
  %s3 = inlined_call_operand.vmem [shape: f32[1,128], index: 3, kind: input, shape index: {}]
  %s4 = inlined_call_operand.hbm [shape: f32[128,128], index: 4, kind: output, shape index: {}]
  %s5 = sld [smem:[#allocation0]]
  $region46: #{tpu_custom_call.1} parent=0
    _
  %s7 = ssub.s32 1, %s5
  %s8 = scalar_select 0, %s7, %s5
  $region1: #{tpu_custom_call.1} parent=0
    #allocation3 [shape = 'u8[32768]{0}', space=vmem, size = 0x8000, scoped, tag = 'input window, operand 0, single buffered']
    #allocation4 [shape = 's32[1]{0}', space=sflag, size = 0x4, scoped, tag = 'scoped memory for tpu_custom_call.1']
    #allocation5 [shape = 's32[1]{0}', space=sflag, size = 0x4, scoped, tag = 'scoped memory for tpu_custom_call.1']
    #allocation6 [shape = 'u8[32768]{0}', space=vmem, size = 0x8000, scoped, tag = 'input window, operand 1, single buffered']
    #allocation7 [shape = 's32[1]{0}', space=sflag, size = 0x4, scoped, tag = 'scoped memory for tpu_custom_call.1']
    #allocation8 [shape = 'u8[32768]{0}', space=vmem, size = 0x8000, scoped, tag = 'input window, operand 2, single buffered']
    #allocation9 [shape = 'u8[65536]{0}', space=vmem, size = 0x10000, scoped, tag = 'output window, operand 0, single buffered']
    %9 = vsyncpa [#allocation4], 0
    %10 = vsyncpa [#allocation7], 0
    %11 = vsyncpa [#allocation5], 0
    // Predicated region
    $region2: #{tpu_custom_call.1} parent=1 // pred_check
      _
    $region3: #{tpu_custom_call.1} parent=1 // pred_check_branch
      %13 = sbr.rel (0) target = $region5
    $region4: #{tpu_custom_call.1} parent=1 // pred_region
      %s15 = ssub.s32 1024, 1024
      %16 = vsyncadd [#allocation4], %s15
      %s17 = sshll.u32 [#allocation3], 4
      %s18 = int_to_ptr.vmem [resolvable:$true] %s17
      %23 = dma.hbm_to_vmem [thread:$0]  %s0, 1024, %s18, [#allocation4], 64, 64, 4
    $region5: #{tpu_custom_call.1} parent=1 // pred_fallthru
      _
    // Predicated region
    $region6: #{tpu_custom_call.1} parent=1 // pred_check
      _
    $region7: #{tpu_custom_call.1} parent=1 // pred_check_branch
      %25 = sbr.rel (0) target = $region9
    $region8: #{tpu_custom_call.1} parent=1 // pred_region
      %s27 = ssub.s32 1024, 1024
      %28 = vsyncadd [#allocation7], %s27
      %s29 = sshll.u32 [#allocation6], 4
      %s30 = int_to_ptr.vmem [resolvable:$true] %s29
      %35 = dma.hbm_to_vmem [thread:$0]  %s1, 1024, %s30, [#allocation7], 64, 64, 4
    $region9: #{tpu_custom_call.1} parent=1 // pred_fallthru
      _
    // Predicated region
    $region10: #{tpu_custom_call.1} parent=1 // pred_check
      _
    $region11: #{tpu_custom_call.1} parent=1 // pred_check_branch
      %37 = sbr.rel (0) target = $region13
    $region12: #{tpu_custom_call.1} parent=1 // pred_region
      %s39 = ssub.s32 1024, 1024
      %40 = vsyncadd [#allocation7], %s39
      %s41 = sshll.u32 [#allocation8], 4
      %s42 = int_to_ptr.vmem [resolvable:$true] %s41
      %47 = dma.hbm_to_vmem [thread:$0]  %s2, 1024, %s42, [#allocation7], 64, 64, 4
    $region13: #{tpu_custom_call.1} parent=1 // pred_fallthru
      _
    // Predicated region
    $region14: #{tpu_custom_call.1} parent=1 // pred_check
      _
    $region15: #{tpu_custom_call.1} parent=1 // pred_check_branch
      %49 = sbr.rel (0) target = $region17
    $region16: #{tpu_custom_call.1} parent=1 // pred_region
      _
    $region17: #{tpu_custom_call.1} parent=1 // pred_fallthru
      _
    // Predicated region
    $region18: #{tpu_custom_call.1} parent=1 // pred_check
      _
    $region19: #{tpu_custom_call.1} parent=1 // pred_check_branch
      %51 = sbr.rel (0) target = $region21
    $region20: #{tpu_custom_call.1} parent=1 // pred_region
      %52 = dma.done [#allocation4], 1024
    $region21: #{tpu_custom_call.1} parent=1 // pred_fallthru
      _
    // Predicated region
    $region22: #{tpu_custom_call.1} parent=1 // pred_check
      _
    $region23: #{tpu_custom_call.1} parent=1 // pred_check_branch
      %54 = sbr.rel (0) target = $region25
    $region24: #{tpu_custom_call.1} parent=1 // pred_region
      %55 = dma.done [#allocation7], 1024
    $region25: #{tpu_custom_call.1} parent=1 // pred_fallthru
      _
    // Predicated region
    $region26: #{tpu_custom_call.1} parent=1 // pred_check
      _
    $region27: #{tpu_custom_call.1} parent=1 // pred_check_branch
      %57 = sbr.rel (0) target = $region29
    $region28: #{tpu_custom_call.1} parent=1 // pred_region
      %58 = dma.done [#allocation7], 1024
    $region29: #{tpu_custom_call.1} parent=1 // pred_fallthru
      _
    %p60 = scmp.eq.s32.totalorder 0, 0
    // Predicated region
    $region30: #{tpu_custom_call.1} parent=1 // pred_check
      %p61 = pneg %p60
    $region31: #{tpu_custom_call.1} parent=1 // pred_check_branch
      %63 = sbr.rel (%p61) target = $region33
    $region32: #{tpu_custom_call.1} parent=1 // pred_region
      %64 = vst [vmem:[#allocation2] sm:$0xff] 0.0
      %65 = vst [vmem:[#allocation2 + $0x8] sm:$0xff] 0.0
      %66 = vst [vmem:[#allocation2 + $0x10] sm:$0xff] 0.0
      %67 = vst [vmem:[#allocation2 + $0x18] sm:$0xff] 0.0
      %68 = vst [vmem:[#allocation2 + $0x20] sm:$0xff] 0.0
      %69 = vst [vmem:[#allocation2 + $0x28] sm:$0xff] 0.0
      %70 = vst [vmem:[#allocation2 + $0x30] sm:$0xff] 0.0
      %71 = vst [vmem:[#allocation2 + $0x38] sm:$0xff] 0.0
      %72 = vst [vmem:[#allocation2 + $0x40] sm:$0xff] 0.0
      %73 = vst [vmem:[#allocation2 + $0x48] sm:$0xff] 0.0
      %74 = vst [vmem:[#allocation2 + $0x50] sm:$0xff] 0.0
      %75 = vst [vmem:[#allocation2 + $0x58] sm:$0xff] 0.0
      %76 = vst [vmem:[#allocation2 + $0x60] sm:$0xff] 0.0
      %77 = vst [vmem:[#allocation2 + $0x68] sm:$0xff] 0.0
      %78 = vst [vmem:[#allocation2 + $0x70] sm:$0xff] 0.0
      %79 = vst [vmem:[#allocation2 + $0x78] sm:$0xff] 0.0
    $region33: #{tpu_custom_call.1} parent=1 // pred_fallthru
      _
    %v80 = vld [vmem:[#allocation3] sm:$0xf]
    %v81 = vld [vmem:[#allocation3 + $0x4] sm:$0xf]
    %v82 = vld [vmem:[#allocation3 + $0x8] sm:$0xf]
    %v83 = vld [vmem:[#allocation3 + $0xc] sm:$0xf]
    %v84 = vld [vmem:[#allocation3 + $0x10] sm:$0xf]
    %v85 = vld [vmem:[#allocation3 + $0x14] sm:$0xf]
    %v86 = vld [vmem:[#allocation3 + $0x18] sm:$0xf]
    %v87 = vld [vmem:[#allocation3 + $0x1c] sm:$0xf]
    %v88 = vld [vmem:[#allocation3 + $0x20] sm:$0xf]
    %v89 = vld [vmem:[#allocation3 + $0x24] sm:$0xf]
    %v90 = vld [vmem:[#allocation3 + $0x28] sm:$0xf]
    %v91 = vld [vmem:[#allocation3 + $0x2c] sm:$0xf]
    %v92 = vld [vmem:[#allocation3 + $0x30] sm:$0xf]
    %v93 = vld [vmem:[#allocation3 + $0x34] sm:$0xf]
    %v94 = vld [vmem:[#allocation3 + $0x38] sm:$0xf]
    %v95 = vld [vmem:[#allocation3 + $0x3c] sm:$0xf]
    %v96 = vld [vmem:[#allocation6] sm:$0xf]
    %v97 = vld [vmem:[#allocation6 + $0x4] sm:$0xf]
    %v98 = vld [vmem:[#allocation6 + $0x8] sm:$0xf]
    %v99 = vld [vmem:[#allocation6 + $0xc] sm:$0xf]
    %v100 = vld [vmem:[#allocation6 + $0x10] sm:$0xf]
    %v101 = vld [vmem:[#allocation6 + $0x14] sm:$0xf]
    %v102 = vld [vmem:[#allocation6 + $0x18] sm:$0xf]
    %v103 = vld [vmem:[#allocation6 + $0x1c] sm:$0xf]
    %v104 = vld [vmem:[#allocation6 + $0x20] sm:$0xf]
    %v105 = vld [vmem:[#allocation6 + $0x24] sm:$0xf]
    %v106 = vld [vmem:[#allocation6 + $0x28] sm:$0xf]
    %v107 = vld [vmem:[#allocation6 + $0x2c] sm:$0xf]
    %v108 = vld [vmem:[#allocation6 + $0x30] sm:$0xf]
    %v109 = vld [vmem:[#allocation6 + $0x34] sm:$0xf]
    %v110 = vld [vmem:[#allocation6 + $0x38] sm:$0xf]
    %v111 = vld [vmem:[#allocation6 + $0x3c] sm:$0xf]
    %v128 = vunpack.c.l.b16 %v80
    %v129 = vunpack.c.l.b16 %v81
    %v130 = vunpack.c.l.b16 %v82
    %v131 = vunpack.c.l.b16 %v83
    %v132 = vunpack.c.l.b16 %v84
    %v133 = vunpack.c.l.b16 %v85
    %v134 = vunpack.c.l.b16 %v86
    %v135 = vunpack.c.l.b16 %v87
    %v136 = vunpack.c.l.b16 %v88
    %v137 = vunpack.c.l.b16 %v89
    %v138 = vunpack.c.l.b16 %v90
    %v139 = vunpack.c.l.b16 %v91
    %v140 = vunpack.c.l.b16 %v92
    %v141 = vunpack.c.l.b16 %v93
    %v142 = vunpack.c.l.b16 %v94
    %v143 = vunpack.c.l.b16 %v95
    %v144 = vpack.c.b16 %v129, %v128
    %v145 = vpack.c.b16 %v131, %v130
    %v146 = vpack.c.b16 %v133, %v132
    %v147 = vpack.c.b16 %v135, %v134
    %v148 = vpack.c.b16 %v137, %v136
    %v149 = vpack.c.b16 %v139, %v138
    %v150 = vpack.c.b16 %v141, %v140
    %v151 = vpack.c.b16 %v143, %v142
    %v176 = vunpack.c.l.b16 %v96
    %v177 = vunpack.c.l.b16 %v97
    %v178 = vunpack.c.l.b16 %v98
    %v179 = vunpack.c.l.b16 %v99
    %v180 = vunpack.c.l.b16 %v100
    %v181 = vunpack.c.l.b16 %v101
    %v182 = vunpack.c.l.b16 %v102
    %v183 = vunpack.c.l.b16 %v103
    %v184 = vunpack.c.l.b16 %v104
    %v185 = vunpack.c.l.b16 %v105
    %v186 = vunpack.c.l.b16 %v106
    %v187 = vunpack.c.l.b16 %v107
    %v188 = vunpack.c.l.b16 %v108
    %v189 = vunpack.c.l.b16 %v109
    %v190 = vunpack.c.l.b16 %v110
    %v191 = vunpack.c.l.b16 %v111
    %v192 = vpack.c.b16 %v177, %v176
    %v193 = vpack.c.b16 %v179, %v178
    %v194 = vpack.c.b16 %v181, %v180
    %v195 = vpack.c.b16 %v183, %v182
    %v196 = vpack.c.b16 %v185, %v184
    %v197 = vpack.c.b16 %v187, %v186
    %v198 = vpack.c.b16 %v189, %v188
    %v199 = vpack.c.b16 %v191, %v190
    %208 = vmatprep.subr.bf16.mxu0 0
    %209 = vmatpush1.bf16.msra.mxu0 %v199
    %210 = vmatprep.subr.bf16.mxu0 0
    %211 = vmatpush1.bf16.msra.mxu0 %v198
    %212 = vmatprep.subr.bf16.mxu0 0
    %213 = vmatpush1.bf16.msra.mxu0 %v197
    %214 = vmatprep.subr.bf16.mxu0 0
    %215 = vmatpush1.bf16.msra.mxu0 %v196
    %216 = vmatprep.subr.bf16.mxu0 0
    %217 = vmatpush1.bf16.msra.mxu0 %v195
    %218 = vmatprep.subr.bf16.mxu0 0
    %219 = vmatpush1.bf16.msra.mxu0 %v194
    %220 = vmatprep.subr.bf16.mxu0 0
    %221 = vmatpush1.bf16.msra.mxu0 %v193
    %222 = vmatprep.subr.bf16.mxu0 0
    %223 = vmatpush1.bf16.msra.mxu0 %v192
    %224 = vmatprep.subr.bf16.mxu0 0
    %225 = vmatpush2.bf16.msra.mxu0 0
    %226 = vmatprep.subr.bf16.mxu0 0
    %227 = vmatpush2.bf16.msra.mxu0 0
    %228 = vmatprep.subr.bf16.mxu0 0
    %229 = vmatpush2.bf16.msra.mxu0 0
    %230 = vmatprep.subr.bf16.mxu0 0
    %231 = vmatpush2.bf16.msra.mxu0 0
    %232 = vmatprep.subr.bf16.mxu0 0
    %233 = vmatpush2.bf16.msra.mxu0 0
    %234 = vmatprep.subr.bf16.mxu0 0
    %235 = vmatpush2.bf16.msra.mxu0 0
    %236 = vmatprep.subr.bf16.mxu0 0
    %237 = vmatpush2.bf16.msra.mxu0 0
    %238 = vmatprep.subr.bf16.mxu0 0
    %239 = vmatpush2.bf16.msra.mxu0 0
    %240 = vmatprep.mubr.bf16.mxu0 0
    %241 = vmatmul.mubr.bf16.gmra.mxu0 %v144
    %v242 = vpop.f32.mrf.mxu0
    %v243 = vadd.f32 0.0, %v242
    %v244 = vpop.f32.mrf.mxu0
    %v245 = vpop.f32.mrf.mxu0
    %v246 = vadd.f32 0.0, %v245
    %v247 = vpop.f32.mrf.mxu0
    %248 = vmatprep.mubr.bf16.mxu0 0
    %249 = vmatmul.mubr.bf16.gmra.mxu0 %v145
    %v250 = vpop.f32.mrf.mxu0
    %v251 = vadd.f32 0.0, %v250
    %v252 = vpop.f32.mrf.mxu0
    %v253 = vpop.f32.mrf.mxu0
    %v254 = vadd.f32 0.0, %v253
    %v255 = vpop.f32.mrf.mxu0
    %256 = vmatprep.mubr.bf16.mxu0 0
    %257 = vmatmul.mubr.bf16.gmra.mxu0 %v146
    %v258 = vpop.f32.mrf.mxu0
    %v259 = vadd.f32 0.0, %v258
    %v260 = vpop.f32.mrf.mxu0
    %v261 = vpop.f32.mrf.mxu0
    %v262 = vadd.f32 0.0, %v261
    %v263 = vpop.f32.mrf.mxu0
    %264 = vmatprep.mubr.bf16.mxu0 0
    %265 = vmatmul.mubr.bf16.gmra.mxu0 %v147
    %v266 = vpop.f32.mrf.mxu0
    %v267 = vadd.f32 0.0, %v266
    %v268 = vpop.f32.mrf.mxu0
    %v269 = vpop.f32.mrf.mxu0
    %v270 = vadd.f32 0.0, %v269
    %v271 = vpop.f32.mrf.mxu0
    %272 = vmatprep.mubr.bf16.mxu0 0
    %273 = vmatmul.mubr.bf16.gmra.mxu0 %v148
    %v274 = vpop.f32.mrf.mxu0
    %v275 = vadd.f32 0.0, %v274
    %v276 = vpop.f32.mrf.mxu0
    %v277 = vpop.f32.mrf.mxu0
    %v278 = vadd.f32 0.0, %v277
    %v279 = vpop.f32.mrf.mxu0
    %280 = vmatprep.mubr.bf16.mxu0 0
    %281 = vmatmul.mubr.bf16.gmra.mxu0 %v149
    %v282 = vpop.f32.mrf.mxu0
    %v283 = vadd.f32 0.0, %v282
    %v284 = vpop.f32.mrf.mxu0
    %v285 = vpop.f32.mrf.mxu0
    %v286 = vadd.f32 0.0, %v285
    %v287 = vpop.f32.mrf.mxu0
    %288 = vmatprep.mubr.bf16.mxu0 0
    %289 = vmatmul.mubr.bf16.gmra.mxu0 %v150
    %v290 = vpop.f32.mrf.mxu0
    %v291 = vadd.f32 0.0, %v290
    %v292 = vpop.f32.mrf.mxu0
    %v293 = vpop.f32.mrf.mxu0
    %v294 = vadd.f32 0.0, %v293
    %v295 = vpop.f32.mrf.mxu0
    %296 = vmatprep.mubr.bf16.mxu0 0
    %297 = vmatmul.mubr.bf16.gmra.mxu0 %v151
    %v298 = vpop.f32.mrf.mxu0
    %v299 = vadd.f32 0.0, %v298
    %v300 = vpop.f32.mrf.mxu0
    %v301 = vpop.f32.mrf.mxu0
    %v302 = vadd.f32 0.0, %v301
    %v303 = vpop.f32.mrf.mxu0
    %304 = vdwg.mxu0
    %v305 = vld [vmem:[#allocation2] sm:$0xff]
    %v306 = vld [vmem:[#allocation2 + $0x8] sm:$0xff]
    %v307 = vld [vmem:[#allocation2 + $0x10] sm:$0xff]
    %v308 = vld [vmem:[#allocation2 + $0x18] sm:$0xff]
    %v309 = vld [vmem:[#allocation2 + $0x20] sm:$0xff]
    %v310 = vld [vmem:[#allocation2 + $0x28] sm:$0xff]
    %v311 = vld [vmem:[#allocation2 + $0x30] sm:$0xff]
    %v312 = vld [vmem:[#allocation2 + $0x38] sm:$0xff]
    %v313 = vld [vmem:[#allocation2 + $0x40] sm:$0xff]
    %v314 = vld [vmem:[#allocation2 + $0x48] sm:$0xff]
    %v315 = vld [vmem:[#allocation2 + $0x50] sm:$0xff]
    %v316 = vld [vmem:[#allocation2 + $0x58] sm:$0xff]
    %v317 = vld [vmem:[#allocation2 + $0x60] sm:$0xff]
    %v318 = vld [vmem:[#allocation2 + $0x68] sm:$0xff]
    %v319 = vld [vmem:[#allocation2 + $0x70] sm:$0xff]
    %v320 = vld [vmem:[#allocation2 + $0x78] sm:$0xff]
    %v321 = vld [vmem:[#allocation8] sm:$0xf]
    %v322 = vld [vmem:[#allocation8 + $0x4] sm:$0xf]
    %v323 = vld [vmem:[#allocation8 + $0x8] sm:$0xf]
    %v324 = vld [vmem:[#allocation8 + $0xc] sm:$0xf]
    %v325 = vld [vmem:[#allocation8 + $0x10] sm:$0xf]
    %v326 = vld [vmem:[#allocation8 + $0x14] sm:$0xf]
    %v327 = vld [vmem:[#allocation8 + $0x18] sm:$0xf]
    %v328 = vld [vmem:[#allocation8 + $0x1c] sm:$0xf]
    %v329 = vld [vmem:[#allocation8 + $0x20] sm:$0xf]
    %v330 = vld [vmem:[#allocation8 + $0x24] sm:$0xf]
    %v331 = vld [vmem:[#allocation8 + $0x28] sm:$0xf]
    %v332 = vld [vmem:[#allocation8 + $0x2c] sm:$0xf]
    %v333 = vld [vmem:[#allocation8 + $0x30] sm:$0xf]
    %v334 = vld [vmem:[#allocation8 + $0x34] sm:$0xf]
    %v335 = vld [vmem:[#allocation8 + $0x38] sm:$0xf]
    %v336 = vld [vmem:[#allocation8 + $0x3c] sm:$0xf]
    %v337 = vpack.c.bf16 %v246, %v243
    %v338 = vpack.c.bf16 %v254, %v251
    %v339 = vpack.c.bf16 %v262, %v259
    %v340 = vpack.c.bf16 %v270, %v267
    %v341 = vpack.c.bf16 %v278, %v275
    %v342 = vpack.c.bf16 %v286, %v283
    %v343 = vpack.c.bf16 %v294, %v291
    %v344 = vpack.c.bf16 %v302, %v299
    %v361 = vunpack.c.l.b16 %v321
    %v362 = vunpack.c.l.b16 %v322
    %v363 = vunpack.c.l.b16 %v323
    %v364 = vunpack.c.l.b16 %v324
    %v365 = vunpack.c.l.b16 %v325
    %v366 = vunpack.c.l.b16 %v326
    %v367 = vunpack.c.l.b16 %v327
    %v368 = vunpack.c.l.b16 %v328
    %v369 = vunpack.c.l.b16 %v329
    %v370 = vunpack.c.l.b16 %v330
    %v371 = vunpack.c.l.b16 %v331
    %v372 = vunpack.c.l.b16 %v332
    %v373 = vunpack.c.l.b16 %v333
    %v374 = vunpack.c.l.b16 %v334
    %v375 = vunpack.c.l.b16 %v335
    %v376 = vunpack.c.l.b16 %v336
    %v377 = vpack.c.b16 %v362, %v361
    %v378 = vpack.c.b16 %v364, %v363
    %v379 = vpack.c.b16 %v366, %v365
    %v380 = vpack.c.b16 %v368, %v367
    %v381 = vpack.c.b16 %v370, %v369
    %v382 = vpack.c.b16 %v372, %v371
    %v383 = vpack.c.b16 %v374, %v373
    %v384 = vpack.c.b16 %v376, %v375
    %393 = vmatprep.subr.bf16.mxu0 0
    %394 = vmatpush1.bf16.msra.mxu0 %v344
    %395 = vmatprep.subr.bf16.mxu0 0
    %396 = vmatpush1.bf16.msra.mxu0 %v343
    %397 = vmatprep.subr.bf16.mxu0 0
    %398 = vmatpush1.bf16.msra.mxu0 %v342
    %399 = vmatprep.subr.bf16.mxu0 0
    %400 = vmatpush1.bf16.msra.mxu0 %v341
    %401 = vmatprep.subr.bf16.mxu0 0
    %402 = vmatpush1.bf16.msra.mxu0 %v340
    %403 = vmatprep.subr.bf16.mxu0 0
    %404 = vmatpush1.bf16.msra.mxu0 %v339
    %405 = vmatprep.subr.bf16.mxu0 0
    %406 = vmatpush1.bf16.msra.mxu0 %v338
    %407 = vmatprep.subr.bf16.mxu0 0
    %408 = vmatpush1.bf16.msra.mxu0 %v337
    %409 = vmatprep.subr.bf16.mxu0 0
    %410 = vmatpush2.bf16.msra.mxu0 0
    %411 = vmatprep.subr.bf16.mxu0 0
    %412 = vmatpush2.bf16.msra.mxu0 0
    %413 = vmatprep.subr.bf16.mxu0 0
    %414 = vmatpush2.bf16.msra.mxu0 0
    %415 = vmatprep.subr.bf16.mxu0 0
    %416 = vmatpush2.bf16.msra.mxu0 0
    %417 = vmatprep.subr.bf16.mxu0 0
    %418 = vmatpush2.bf16.msra.mxu0 0
    %419 = vmatprep.subr.bf16.mxu0 0
    %420 = vmatpush2.bf16.msra.mxu0 0
    %421 = vmatprep.subr.bf16.mxu0 0
    %422 = vmatpush2.bf16.msra.mxu0 0
    %423 = vmatprep.subr.bf16.mxu0 0
    %424 = vmatpush2.bf16.msra.mxu0 0
    %425 = vmatprep.mubr.bf16.mxu0 0
    %426 = vmatmul.mubr.bf16.gmra.mxu0 %v377
    %v427 = vpop.f32.mrf.mxu0
    %v428 = vadd.f32 0.0, %v427
    %v429 = vpop.f32.mrf.mxu0
    %v430 = vpop.f32.mrf.mxu0
    %v431 = vadd.f32 0.0, %v430
    %v432 = vpop.f32.mrf.mxu0
    %433 = vmatprep.mubr.bf16.mxu0 0
    %434 = vmatmul.mubr.bf16.gmra.mxu0 %v378
    %v435 = vpop.f32.mrf.mxu0
    %v436 = vadd.f32 0.0, %v435
    %v437 = vpop.f32.mrf.mxu0
    %v438 = vpop.f32.mrf.mxu0
    %v439 = vadd.f32 0.0, %v438
    %v440 = vpop.f32.mrf.mxu0
    %441 = vmatprep.mubr.bf16.mxu0 0
    %442 = vmatmul.mubr.bf16.gmra.mxu0 %v379
    %v443 = vpop.f32.mrf.mxu0
    %v444 = vadd.f32 0.0, %v443
    %v445 = vpop.f32.mrf.mxu0
    %v446 = vpop.f32.mrf.mxu0
    %v447 = vadd.f32 0.0, %v446
    %v448 = vpop.f32.mrf.mxu0
    %449 = vmatprep.mubr.bf16.mxu0 0
    %450 = vmatmul.mubr.bf16.gmra.mxu0 %v380
    %v451 = vpop.f32.mrf.mxu0
    %v452 = vadd.f32 0.0, %v451
    %v453 = vpop.f32.mrf.mxu0
    %v454 = vpop.f32.mrf.mxu0
    %v455 = vadd.f32 0.0, %v454
    %v456 = vpop.f32.mrf.mxu0
    %457 = vmatprep.mubr.bf16.mxu0 0
    %458 = vmatmul.mubr.bf16.gmra.mxu0 %v381
    %v459 = vpop.f32.mrf.mxu0
    %v460 = vadd.f32 0.0, %v459
    %v461 = vpop.f32.mrf.mxu0
    %v462 = vpop.f32.mrf.mxu0
    %v463 = vadd.f32 0.0, %v462
    %v464 = vpop.f32.mrf.mxu0
    %465 = vmatprep.mubr.bf16.mxu0 0
    %466 = vmatmul.mubr.bf16.gmra.mxu0 %v382
    %v467 = vpop.f32.mrf.mxu0
    %v468 = vadd.f32 0.0, %v467
    %v469 = vpop.f32.mrf.mxu0
    %v470 = vpop.f32.mrf.mxu0
    %v471 = vadd.f32 0.0, %v470
    %v472 = vpop.f32.mrf.mxu0
    %473 = vmatprep.mubr.bf16.mxu0 0
    %474 = vmatmul.mubr.bf16.gmra.mxu0 %v383
    %v475 = vpop.f32.mrf.mxu0
    %v476 = vadd.f32 0.0, %v475
    %v477 = vpop.f32.mrf.mxu0
    %v478 = vpop.f32.mrf.mxu0
    %v479 = vadd.f32 0.0, %v478
    %v480 = vpop.f32.mrf.mxu0
    %481 = vmatprep.mubr.bf16.mxu0 0
    %482 = vmatmul.mubr.bf16.gmra.mxu0 %v384
    %v483 = vpop.f32.mrf.mxu0
    %v484 = vadd.f32 0.0, %v483
    %v485 = vpop.f32.mrf.mxu0
    %v486 = vpop.f32.mrf.mxu0
    %v487 = vadd.f32 0.0, %v486
    %v488 = vpop.f32.mrf.mxu0
    %489 = vdwg.mxu0
    %v490 = vadd.f32 %v305, %v428
    %v491 = vadd.f32 %v306, %v431
    %v492 = vadd.f32 %v307, %v436
    %v493 = vadd.f32 %v308, %v439
    %v494 = vadd.f32 %v309, %v444
    %v495 = vadd.f32 %v310, %v447
    %v496 = vadd.f32 %v311, %v452
    %v497 = vadd.f32 %v312, %v455
    %v498 = vadd.f32 %v313, %v460
    %v499 = vadd.f32 %v314, %v463
    %v500 = vadd.f32 %v315, %v468
    %v501 = vadd.f32 %v316, %v471
    %v502 = vadd.f32 %v317, %v476
    %v503 = vadd.f32 %v318, %v479
    %v504 = vadd.f32 %v319, %v484
    %v505 = vadd.f32 %v320, %v487
    %506 = vst [vmem:[#allocation2] sm:$0xff] %v490
    %507 = vst [vmem:[#allocation2 + $0x8] sm:$0xff] %v491
    %508 = vst [vmem:[#allocation2 + $0x10] sm:$0xff] %v492
    %509 = vst [vmem:[#allocation2 + $0x18] sm:$0xff] %v493
    %510 = vst [vmem:[#allocation2 + $0x20] sm:$0xff] %v494
    %511 = vst [vmem:[#allocation2 + $0x28] sm:$0xff] %v495
    %512 = vst [vmem:[#allocation2 + $0x30] sm:$0xff] %v496
    %513 = vst [vmem:[#allocation2 + $0x38] sm:$0xff] %v497
    %514 = vst [vmem:[#allocation2 + $0x40] sm:$0xff] %v498
    %515 = vst [vmem:[#allocation2 + $0x48] sm:$0xff] %v499
    %516 = vst [vmem:[#allocation2 + $0x50] sm:$0xff] %v500
    %517 = vst [vmem:[#allocation2 + $0x58] sm:$0xff] %v501
    %518 = vst [vmem:[#allocation2 + $0x60] sm:$0xff] %v502
    %519 = vst [vmem:[#allocation2 + $0x68] sm:$0xff] %v503
    %520 = vst [vmem:[#allocation2 + $0x70] sm:$0xff] %v504
    %521 = vst [vmem:[#allocation2 + $0x78] sm:$0xff] %v505
    // Predicated region
    $region34: #{tpu_custom_call.1} parent=1 // pred_check
      %p522 = pneg %p60
    $region35: #{tpu_custom_call.1} parent=1 // pred_check_branch
      %524 = sbr.rel (%p522) target = $region37
    $region36: #{tpu_custom_call.1} parent=1 // pred_region
      %v525 = vld [vmem:[#allocation2] sm:$0xff]
      %v526 = vld [vmem:[#allocation2 + $0x8] sm:$0xff]
      %v527 = vld [vmem:[#allocation2 + $0x10] sm:$0xff]
      %v528 = vld [vmem:[#allocation2 + $0x18] sm:$0xff]
      %v529 = vld [vmem:[#allocation2 + $0x20] sm:$0xff]
      %v530 = vld [vmem:[#allocation2 + $0x28] sm:$0xff]
      %v531 = vld [vmem:[#allocation2 + $0x30] sm:$0xff]
      %v532 = vld [vmem:[#allocation2 + $0x38] sm:$0xff]
      %v533 = vld [vmem:[#allocation2 + $0x40] sm:$0xff]
      %v534 = vld [vmem:[#allocation2 + $0x48] sm:$0xff]
      %v535 = vld [vmem:[#allocation2 + $0x50] sm:$0xff]
      %v536 = vld [vmem:[#allocation2 + $0x58] sm:$0xff]
      %v537 = vld [vmem:[#allocation2 + $0x60] sm:$0xff]
      %v538 = vld [vmem:[#allocation2 + $0x68] sm:$0xff]
      %v539 = vld [vmem:[#allocation2 + $0x70] sm:$0xff]
      %v540 = vld [vmem:[#allocation2 + $0x78] sm:$0xff]
      %v541 = vld [vmem:[%s3] sm:$0x1]
      %v543 = vlaneseq
      %v544 = vshrl.u32 %v543, 7
      %v545 = vsub.s32 0, %v544
      %v546 = vrot.slane %v541, %v545
      %v548 = vadd.f32 %v525, %v546
      %v549 = vadd.f32 %v526, %v546
      %v550 = vadd.f32 %v527, %v546
      %v551 = vadd.f32 %v528, %v546
      %v552 = vadd.f32 %v529, %v546
      %v553 = vadd.f32 %v530, %v546
      %v554 = vadd.f32 %v531, %v546
      %v555 = vadd.f32 %v532, %v546
      %v556 = vadd.f32 %v533, %v546
      %v557 = vadd.f32 %v534, %v546
      %v558 = vadd.f32 %v535, %v546
      %v559 = vadd.f32 %v536, %v546
      %v560 = vadd.f32 %v537, %v546
      %v561 = vadd.f32 %v538, %v546
      %v562 = vadd.f32 %v539, %v546
      %v563 = vadd.f32 %v540, %v546
      %564 = vst [vmem:[#allocation9] sm:$0xff] %v548
      %565 = vst [vmem:[#allocation9 + $0x8] sm:$0xff] %v549
      %566 = vst [vmem:[#allocation9 + $0x10] sm:$0xff] %v550
      %567 = vst [vmem:[#allocation9 + $0x18] sm:$0xff] %v551
      %568 = vst [vmem:[#allocation9 + $0x20] sm:$0xff] %v552
      %569 = vst [vmem:[#allocation9 + $0x28] sm:$0xff] %v553
      %570 = vst [vmem:[#allocation9 + $0x30] sm:$0xff] %v554
      %571 = vst [vmem:[#allocation9 + $0x38] sm:$0xff] %v555
      %572 = vst [vmem:[#allocation9 + $0x40] sm:$0xff] %v556
      %573 = vst [vmem:[#allocation9 + $0x48] sm:$0xff] %v557
      %574 = vst [vmem:[#allocation9 + $0x50] sm:$0xff] %v558
      %575 = vst [vmem:[#allocation9 + $0x58] sm:$0xff] %v559
      %576 = vst [vmem:[#allocation9 + $0x60] sm:$0xff] %v560
      %577 = vst [vmem:[#allocation9 + $0x68] sm:$0xff] %v561
      %578 = vst [vmem:[#allocation9 + $0x70] sm:$0xff] %v562
      %579 = vst [vmem:[#allocation9 + $0x78] sm:$0xff] %v563
    $region37: #{tpu_custom_call.1} parent=1 // pred_fallthru
      _
    // Predicated region
    $region38: #{tpu_custom_call.1} parent=1 // pred_check
      _
    $region39: #{tpu_custom_call.1} parent=1 // pred_check_branch
      %581 = sbr.rel (0) target = $region41
    $region40: #{tpu_custom_call.1} parent=1 // pred_region
      %s583 = ssub.s32 2048, 2048
      %584 = vsyncadd [#allocation5], %s583
      %s585 = sshll.u32 [#allocation9], 4
      %s586 = int_to_ptr.vmem [resolvable:$true] %s585
      %591 = dma.vmem_to_hbm [thread:$0]  %s586, 2048, %s4, [#allocation5], 128, 128, 8
    $region41: #{tpu_custom_call.1} parent=1 // pred_fallthru
      _
    // Predicated region
    $region42: #{tpu_custom_call.1} parent=1 // pred_check
      _
    $region43: #{tpu_custom_call.1} parent=1 // pred_check_branch
      %593 = sbr.rel (0) target = $region45
    $region44: #{tpu_custom_call.1} parent=1 // pred_region
      %594 = dma.done [#allocation5], 2048
    $region45: #{tpu_custom_call.1} parent=1 // pred_fallthru
      _
    %595 = vsyncpa [#allocation4], 1
    %596 = vsyncpa [#allocation7], 1
    %597 = vsyncpa [#allocation5], 1

</llo_original>
